<compile_context>
chip_gen: v6e
topology: v6e:2x2x1
jax: 0.10.0
libtpu: 0.0.40
codegen_flags: <defaults>
</compile_context>

<pallas_src>
import functools

import jax
import jax.numpy as jnp
from jax.experimental import pallas as pl
from jax.experimental.pallas import tpu as pltpu


def _round8(n: int) -> int:
    return (n + 7) // 8 * 8


def pack_params(params):
    """Pack [(W_i, b_i)] (W_i: (in_i, out_i), b_i: (1, out_i)) into one f32 slab.

    Each segment starts at an 8-row-aligned offset; unused rows/cols are zero.
    Returns (slab, layout, ncols) with layout = ((w_off, fin, b_off, fout), ...).
    """
    ncols = max(w.shape[1] for w, _ in params)
    layout = []
    rows = 0
    for w, _ in params:
        fin, fout = w.shape
        w_off = rows
        rows += _round8(fin)
        b_off = rows
        rows += 8                      # one bias row, padded to a full sublane group
        layout.append((w_off, fin, b_off, fout))
    rows = _round8(rows)

    slab = jnp.zeros((rows, ncols), jnp.float32)
    for (w, b), (w_off, fin, b_off, fout) in zip(params, layout):
        slab = slab.at[w_off:w_off + fin, :fout].set(w.astype(jnp.float32))
        slab = slab.at[b_off, :fout].set(b.reshape(-1).astype(jnp.float32))
    return slab, tuple(layout), ncols


def inf_mlp_kernel(x_ref, slab_ref, o_ref, *, layout, out_dim):
    """Fused Linear-ReLU-...-Linear over one batch tile, then * +inf."""
    h = x_ref[...].astype(jnp.float32)
    n_layers = len(layout)
    for li, (w_off, fin, b_off, fout) in enumerate(layout):
        if h.shape[1] != fin:                      # static (trace-time) check
            h = h[:, :fin]
        w = slab_ref[w_off:w_off + fin, :]         # (fin, ncols), zero-padded cols
        b = slab_ref[b_off:b_off + 1, :]           # (1, ncols),  zero-padded cols
        h = jnp.dot(h, w, preferred_element_type=jnp.float32) + b
        if li != n_layers - 1:
            h = jnp.maximum(h, 0.0)                # ReLU on hidden layers only
    # InfModel.forward: output = mlp(x) * float('inf')  (0 * inf -> NaN, as in torch)
    o_ref[...] = (h[:, :out_dim] * jnp.float32(jnp.inf)).astype(o_ref.dtype)


def inf_model_forward(x, params, *, block_batch=512):
    """params = [(W_i, b_i)] with W_i (in_i, out_i), b_i (1, out_i)."""
    batch, in_dim = x.shape
    out_dim = params[-1][0].shape[1]

    slab, layout, _ = pack_params(params)

    tb = min(block_batch, batch)
    if batch % tb:                     # fall back to one full-batch block
        tb = batch
    grid = (batch // tb,)

    kernel = functools.partial(inf_mlp_kernel, layout=layout, out_dim=out_dim)

    return pl.pallas_call(
        kernel,
        out_shape=jax.ShapeDtypeStruct((batch, out_dim), jnp.float32),
        grid=grid,
        in_specs=[
            pl.BlockSpec((tb, in_dim), lambda i: (i, 0)),          # streamed x tile
            pl.BlockSpec(slab.shape, lambda i: (0, 0)),            # resident params
        ],
        out_specs=pl.BlockSpec((tb, out_dim), lambda i: (i, 0)),
        compiler_params=pltpu.CompilerParams(
            dimension_semantics=("parallel",),                     # megacore on v7x
        ),
    )(x, slab)


def init_params(key, layers):
    """Kaiming-uniform-ish init matching torch.nn.Linear shapes
    (weights stored transposed as (in, out) for the kernel)."""
    params = []
    for i in range(len(layers) - 1):
        fan_in, fan_out = layers[i], layers[i + 1]
        key, kw, kb = jax.random.split(key, 3)
        bound = 1.0 / jnp.sqrt(fan_in)
        w = jax.random.uniform(kw, (fan_in, fan_out), jnp.float32, -bound, bound)
        b = jax.random.uniform(kb, (1, fan_out), jnp.float32, -bound, bound)
        params.append((w, b))
    return params


def _ref_mlp(x, params):
    h = x
    for w, b in params[:-1]:
        h = jnp.maximum(h @ w + b, 0.0)
    w, b = params[-1]
    return h @ w + b


if __name__ == "__main__":
    # layers list as in SingleArgRegression.__init__
    layers = [16, 32, 32, 8]
    batch = 128                      # exercises the batch grid (2 tiles of 64)

    key = jax.random.PRNGKey(0)
    key, kx = jax.random.split(key)
    x = jax.random.normal(kx, (batch, layers[0]), jnp.float32)
    params = init_params(key, layers)

    out = inf_model_forward(x, params, block_batch=64)
    out = jax.block_until_ready(out)

    assert out.shape == (batch, layers[-1])
    # Every element should be +/-inf (or NaN where the pre-scale value was 0).
    assert bool(jnp.all(jnp.isinf(out) | jnp.isnan(out)))

    # Cross-check signs against a pure-JAX reference where the pre-inf value is
    # comfortably away from zero (avoids flakiness from fp rounding near 0).
    pre = _ref_mlp(x, params)
    ref_out = pre * jnp.float32(jnp.inf)
    safe = jnp.abs(pre) > 1e-3
    assert bool(jnp.all(jnp.where(safe, out == ref_out, True)))

    print("KERNEL_OK")
</pallas_src>

<mosaic_0001>
module attributes {stable_mosaic.version = 11 : i64} {
  func.func @inf_mlp_kernel(%arg0: i32, %arg1: memref<64x16xf32, #tpu.memory_space<vmem>>, %arg2: memref<104x32xf32, #tpu.memory_space<vmem>>, %arg3: memref<64x8xf32, #tpu.memory_space<vmem>>) attributes {dimension_semantics = [#tpu.dimension_semantics<parallel>], iteration_bounds = array<i64: 2>, scalar_prefetch = 0 : i64, scratch_operands = 0 : i64, tpu.core_type = #tpu.core_type<tc>, window_params = [{transform_indices = @transform_0, window_bounds = array<i64: 64, 16>}, {pipeline_mode = #tpu.pipeline_mode<synchronous>, transform_indices = @transform_1, window_bounds = array<i64: 104, 32>}, {transform_indices = @transform_2, window_bounds = array<i64: 64, 8>}]} {
    %c0 = arith.constant 0 : index
    %c0_0 = arith.constant 0 : index
    %0 = vector.load %arg1[%c0, %c0_0] : memref<64x16xf32, #tpu.memory_space<vmem>>, vector<64x16xf32>
    %c0_1 = arith.constant 0 : index
    %c0_2 = arith.constant 0 : index
    %1 = vector.load %arg2[%c0_1, %c0_2] : memref<104x32xf32, #tpu.memory_space<vmem>>, vector<16x32xf32>
    %c16 = arith.constant 16 : index
    %c0_3 = arith.constant 0 : index
    %2 = vector.load %arg2[%c16, %c0_3] : memref<104x32xf32, #tpu.memory_space<vmem>>, vector<1x32xf32>
    %cst = arith.constant dense<0.000000e+00> : vector<64x32xf32>
    %3 = tpu.matmul %0, %1, %cst {dimension_numbers = #tpu.dot_dimension_numbers<[1], [0], [0], [1], [0, 0, 1, 1], [], []>} : vector<64x16xf32>, vector<16x32xf32>, vector<64x32xf32> -> vector<64x32xf32>
    %4 = vector.broadcast %2 : vector<1x32xf32> to vector<64x32xf32>
    %5 = arith.addf %3, %4 : vector<64x32xf32>
    %cst_4 = arith.constant 0.000000e+00 : f32
    %6 = vector.broadcast %cst_4 : f32 to vector<64x32xf32>
    %7 = arith.maximumf %5, %6 : vector<64x32xf32>
    %c24 = arith.constant 24 : index
    %c0_5 = arith.constant 0 : index
    %8 = vector.load %arg2[%c24, %c0_5] : memref<104x32xf32, #tpu.memory_space<vmem>>, vector<32x32xf32>
    %c56 = arith.constant 56 : index
    %c0_6 = arith.constant 0 : index
    %9 = vector.load %arg2[%c56, %c0_6] : memref<104x32xf32, #tpu.memory_space<vmem>>, vector<1x32xf32>
    %cst_7 = arith.constant dense<0.000000e+00> : vector<64x32xf32>
    %10 = tpu.matmul %7, %8, %cst_7 {dimension_numbers = #tpu.dot_dimension_numbers<[1], [0], [0], [1], [0, 0, 1, 1], [], []>} : vector<64x32xf32>, vector<32x32xf32>, vector<64x32xf32> -> vector<64x32xf32>
    %11 = vector.broadcast %9 : vector<1x32xf32> to vector<64x32xf32>
    %12 = arith.addf %10, %11 : vector<64x32xf32>
    %cst_8 = arith.constant 0.000000e+00 : f32
    %13 = vector.broadcast %cst_8 : f32 to vector<64x32xf32>
    %14 = arith.maximumf %12, %13 : vector<64x32xf32>
    %c64 = arith.constant 64 : index
    %c0_9 = arith.constant 0 : index
    %15 = vector.load %arg2[%c64, %c0_9] : memref<104x32xf32, #tpu.memory_space<vmem>>, vector<32x32xf32>
    %c96 = arith.constant 96 : index
    %c0_10 = arith.constant 0 : index
    %16 = vector.load %arg2[%c96, %c0_10] : memref<104x32xf32, #tpu.memory_space<vmem>>, vector<1x32xf32>
    %cst_11 = arith.constant dense<0.000000e+00> : vector<64x32xf32>
    %17 = tpu.matmul %14, %15, %cst_11 {dimension_numbers = #tpu.dot_dimension_numbers<[1], [0], [0], [1], [0, 0, 1, 1], [], []>} : vector<64x32xf32>, vector<32x32xf32>, vector<64x32xf32> -> vector<64x32xf32>
    %18 = vector.broadcast %16 : vector<1x32xf32> to vector<64x32xf32>
    %19 = arith.addf %17, %18 : vector<64x32xf32>
    %20 = vector.extract_strided_slice %19 {offsets = [0, 0], sizes = [64, 8], strides = [1, 1]} : vector<64x32xf32> to vector<64x8xf32>
    %cst_12 = arith.constant 0x7F800000 : f32
    %21 = vector.broadcast %cst_12 : f32 to vector<64x8xf32>
    %22 = arith.mulf %20, %21 : vector<64x8xf32>
    %c0_13 = arith.constant 0 : index
    %c0_14 = arith.constant 0 : index
    %23 = vector.load %arg3[%c0_13, %c0_14] : memref<64x8xf32, #tpu.memory_space<vmem>>, vector<64x8xf32>
    tpu.vector_store %arg3[%c0_13, %c0_14], %22 {strides = array<i32>} : memref<64x8xf32, #tpu.memory_space<vmem>>, vector<64x8xf32>,
    return
  }
  func.func @transform_0(%arg0: i32) -> (i32, i32) {
    %c0_i32 = arith.constant 0 : i32
    %c0_i32_0 = arith.constant 0 : i32
    return %arg0, %c0_i32 : i32, i32
  }
  func.func @transform_1(%arg0: i32) -> (i32, i32) {
    %c0_i32 = arith.constant 0 : i32
    %c0_i32_0 = arith.constant 0 : i32
    %c0_i32_1 = arith.constant 0 : i32
    return %c0_i32, %c0_i32_0 : i32, i32
  }
  func.func @transform_2(%arg0: i32) -> (i32, i32) {
    %c0_i32 = arith.constant 0 : i32
    %c0_i32_0 = arith.constant 0 : i32
    return %arg0, %c0_i32 : i32, i32
  }
}

</mosaic_0001>

<llo_original>
// kernel: tpu_custom_call.1
$region0: #{tpu_custom_call.1}
  #allocation0 [shape = 'u32[]', space=smem, size = 0x4, offset = 0x4, fixed_abs, tag = 'smem constant byte address 0x4 - core index']
  #allocation1 [shape = 'u32[144,128]{1,0:T(1,128)}', space=vmem, size = 0x12000, scoped, tag = 'internal scratch']
  %s0 = inlined_call_operand.vmem [shape: f32[128,16], index: 0, kind: input, shape index: {}]
  %s1 = inlined_call_operand.vmem [shape: f32[104,32], index: 1, kind: input, shape index: {}]
  %s2 = inlined_call_operand.vmem [shape: f32[128,8], index: 2, kind: output, shape index: {}]
  %s3 = sld [smem:[#allocation0]]
  $region41: #{tpu_custom_call.1} parent=0
    _
  %s5 = ssub.s32 1, %s3
  %s6 = scalar_select 0, %s5, %s3
  loop: start=0, step=1, limit=4
  $region2: #{tpu_custom_call.1} parent=0 // loop_pre_header
    _
  $region3: #{tpu_custom_call.1} parent=0 // loop_header
    %s8 = sphi 0, %s12
    %p9 = scmp.ge.s32.totalorder %s8, 4
    %s18 = sphi 0, %s20
    %s21 = sphi 0, %s18
    %s22 = sphi 0, %s21
    %s38 = sphi 0, %s22
    %s42 = sphi 0, %s42
    %s44 = sphi 0, %s42
    %s45 = sphi 0, %s44
    %s59 = sphi 0, %s45
    %s65 = sphi 0, %s67
    %s68 = sphi 0, %s65
    %s69 = sphi 0, %s68
    %s85 = sphi 0, %s69
  $region4: #{tpu_custom_call.1} parent=0 // loop_header_branch
    %11 = sbr.rel (%p9) target = $region8
  $region5: #{tpu_custom_call.1} parent=0 // loop_body
    %s13 = ssub.s32 %s8, 1
    %s14 = ssub.s32 %s8, 2
    %s15 = sadd.s32 %s8, 1
    %s16 = ssub.s32 %s8, %s15
    %p17 = scmp.eq.s32.totalorder %s16, 0
    %s19 = sadd.s32 %s18, 1
    %s20 = scalar_select %p17, %s18, %s19
    %p23 = pneg %p17
    %p24 = scmp.eq.s32.totalorder %s8, 1
    %p25 = por %p23, %p24
    %p26 = scmp.ne.s32.totalorder %s18, %s21
    %p27 = scmp.eq.s32.totalorder %s8, 0
    %p28 = por %p26, %p27
    %p29 = scmp.ne.s32.totalorder %s18, %s21
    %p30 = scmp.eq.s32.totalorder %s13, 1
    %p31 = por %p29, %p30
    %p32 = scmp.ne.s32.totalorder %s21, %s22
    %p33 = scmp.eq.s32.totalorder %s13, 0
    %p34 = por %p32, %p33
    %p35 = scmp.ne.s32.totalorder %s21, %s22
    %p36 = scmp.eq.s32.totalorder %s14, 1
    %p37 = por %p35, %p36
    %p39 = scmp.ne.s32.totalorder %s22, %s38
    %p40 = scmp.eq.s32.totalorder %s14, 0
    %p41 = por %p39, %p40
    %s43 = sadd.s32 %s42, 1
    %p46 = scmp.eq.s32.totalorder %s8, 1
    %p47 = scmp.ne.s32.totalorder %s42, %s44
    %p48 = scmp.eq.s32.totalorder %s8, 0
    %p49 = por %p47, %p48
    %p50 = scmp.ne.s32.totalorder %s42, %s44
    %p51 = scmp.eq.s32.totalorder %s13, 1
    %p52 = por %p50, %p51
    %p53 = scmp.ne.s32.totalorder %s44, %s45
    %p54 = scmp.eq.s32.totalorder %s13, 0
    %p55 = por %p53, %p54
    %p56 = scmp.ne.s32.totalorder %s44, %s45
    %p57 = scmp.eq.s32.totalorder %s14, 1
    %p58 = por %p56, %p57
    %p60 = scmp.ne.s32.totalorder %s45, %s59
    %p61 = scmp.eq.s32.totalorder %s14, 0
    %p62 = por %p60, %p61
    %s63 = ssub.s32 %s8, %s15
    %p64 = scmp.eq.s32.totalorder %s63, 0
    %s66 = sadd.s32 %s65, 1
    %s67 = scalar_select %p64, %s65, %s66
    %p70 = pneg %p64
    %p71 = scmp.eq.s32.totalorder %s8, 1
    %p72 = por %p70, %p71
    %p73 = scmp.ne.s32.totalorder %s65, %s68
    %p74 = scmp.eq.s32.totalorder %s8, 0
    %p75 = por %p73, %p74
    %p76 = scmp.ne.s32.totalorder %s65, %s68
    %p77 = scmp.eq.s32.totalorder %s13, 1
    %p78 = por %p76, %p77
    %p79 = scmp.ne.s32.totalorder %s68, %s69
    %p80 = scmp.eq.s32.totalorder %s13, 0
    %p81 = por %p79, %p80
    %p82 = scmp.ne.s32.totalorder %s68, %s69
    %p83 = scmp.eq.s32.totalorder %s14, 1
    %p84 = por %p82, %p83
    %p86 = scmp.ne.s32.totalorder %s69, %s85
    %p87 = scmp.eq.s32.totalorder %s14, 0
    %p88 = por %p86, %p87
    %p89 = scmp.le.s32.totalorder 1, %s8
    %p90 = scmp.lt.s32.totalorder %s8, 3
    %p91 = pnand %p89, %p90
    %p92 = pneg %p91
    // Predicated region
    $region9: #{tpu_custom_call.1} parent=5 // pred_check
      _
    $region10: #{tpu_custom_call.1} parent=5 // pred_check_branch
      %94 = sbr.rel (%p91) target = $region12
    $region11: #{tpu_custom_call.1} parent=5 // pred_region
      %s95 = ssub.s32 %s8, 1
      // Predicated region
      $region13: #{tpu_custom_call.1} parent=11 // pred_check
        %p96 = pneg %p55
      $region14: #{tpu_custom_call.1} parent=11 // pred_check_branch
        %98 = sbr.rel (%p96) target = $region16
      $region15: #{tpu_custom_call.1} parent=11 // pred_region
        _
      $region16: #{tpu_custom_call.1} parent=11 // pred_fallthru
        _
    $region12: #{tpu_custom_call.1} parent=5 // pred_fallthru
      _
    %p99 = scmp.lt.s32.totalorder %s8, 2
    // Predicated region
    $region17: #{tpu_custom_call.1} parent=5 // pred_check
      %p100 = pneg %p99
    $region18: #{tpu_custom_call.1} parent=5 // pred_check_branch
      %102 = sbr.rel (%p100) target = $region20
    $region19: #{tpu_custom_call.1} parent=5 // pred_region
      // Predicated region
      $region21: #{tpu_custom_call.1} parent=19 // pred_check
        %p103 = pneg %p28
      $region22: #{tpu_custom_call.1} parent=19 // pred_check_branch
        %105 = sbr.rel (%p103) target = $region24
      $region23: #{tpu_custom_call.1} parent=19 // pred_region
        %s106 = smul.u32 8, %s8
        %p107 = scmp.lt.s32.totalorder %s106, 15
        %s108 = scalar_select %p107, %s106, 15
        %s109 = smul.addr %s108, 8
        %s110 = scalar_lea.vmem %s0, %s109
        %s111 = smul.u32 8, %s8
      $region24: #{tpu_custom_call.1} parent=19 // pred_fallthru
        _
    $region20: #{tpu_custom_call.1} parent=5 // pred_fallthru
      _
    %p112 = scmp.le.s32.totalorder 1, %s8
    %p113 = scmp.lt.s32.totalorder %s8, 3
    %p114 = pnand %p112, %p113
    %p115 = pneg %p114
    // Predicated region
    $region25: #{tpu_custom_call.1} parent=5 // pred_check
      _
    $region26: #{tpu_custom_call.1} parent=5 // pred_check_branch
      %117 = sbr.rel (%p114) target = $region28
    $region27: #{tpu_custom_call.1} parent=5 // pred_region
      %s118 = ssub.s32 %s8, 1
      %s119 = smul.u32 8, %s13
      %p120 = scmp.lt.s32.totalorder %s119, 15
      %s121 = scalar_select %p120, %s119, 15
      %s122 = smul.addr %s121, 8
      %s123 = scalar_lea.vmem %s0, %s122
      %p124 = pneg %p34
      %p125 = pneg %p31
      %p126 = pneg %p55
      %p127 = pneg %p52
      %p128 = pneg %p81
      %p129 = pneg %p78
      %s130 = smul.u32 8, %s13
      %p131 = scmp.lt.s32.totalorder %s130, 15
      %s132 = scalar_select %p131, %s130, 15
      %s133 = smul.addr %s132, 8
      %s134 = scalar_lea.vmem %s2, %s133
      %s135 = smul.u32 8, %s13
      %p136 = scmp.lt.s32.totalorder %s135, 15
      %s137 = scalar_select %p136, %s135, 15
      %s138 = smul.addr %s137, 8
      %s139 = scalar_lea.vmem %s0, %s138
      %s140 = smul.u32 8, %s13
      %s141 = smul.u32 8, %s13
      %p142 = scmp.lt.s32.totalorder %s141, 15
      %s143 = scalar_select %p142, %s141, 15
      %s144 = smul.addr %s143, 8
      %s145 = scalar_lea.vmem %s2, %s144
      %s146 = smul.u32 8, %s13
      %v147 = vld [vmem:[%s139] sm:$0xff]
      %v148 = vld [vmem:[%s139 + $0x8] sm:$0xff]
      %v149 = vld [vmem:[%s139 + $0x10] sm:$0xff]
      %v150 = vld [vmem:[%s139 + $0x18] sm:$0xff]
      %v151 = vld [vmem:[%s139 + $0x20] sm:$0xff]
      %v152 = vld [vmem:[%s139 + $0x28] sm:$0xff]
      %v153 = vld [vmem:[%s139 + $0x30] sm:$0xff]
      %v154 = vld [vmem:[%s139 + $0x38] sm:$0xff]
      %v155 = vld [vmem:[%s1] sm:$0xff]
      %v156 = vld [vmem:[%s1 + $0x8] sm:$0xff]
      %v157 = vld [vmem:[%s1 + $0x10] sm:$0x1]
      %v158 = vlaneseq
      %v159 = vshrl.u32 %v158, 7
      %v160 = vsub.s32 0, %v159
      %v161 = vrot.slane %v157, %v160
      %vm162 = vcmask 130048
      %v164 = vsel %vm162, %v147, 0
      %v167 = vsel %vm162, %v148, 0
      %v170 = vsel %vm162, %v149, 0
      %v173 = vsel %vm162, %v150, 0
      %v176 = vsel %vm162, %v151, 0
      %v179 = vsel %vm162, %v152, 0
      %v182 = vsel %vm162, %v153, 0
      %v185 = vsel %vm162, %v154, 0
      %187 = vmatprep.subr.mxu0 0.0
      %188 = vmatpush1.msra.mxu0 0.0
      %189 = vmatprep.subr.mxu0 0.0
      %190 = vmatpush1.msra.mxu0 0.0
      %191 = vmatprep.subr.mxu0 0.0
      %192 = vmatpush1.msra.mxu0 0.0
      %193 = vmatprep.subr.mxu0 0.0
      %194 = vmatpush1.msra.mxu0 0.0
      %195 = vmatprep.subr.mxu0 0.0
      %196 = vmatpush1.msra.mxu0 0.0
      %197 = vmatprep.subr.mxu0 0.0
      %198 = vmatpush1.msra.mxu0 0.0
      %199 = vmatprep.subr.mxu0 0.0
      %200 = vmatpush1.msra.mxu0 0.0
      %201 = vmatprep.subr.mxu0 0.0
      %202 = vmatpush1.msra.mxu0 0.0
      %203 = vmatprep.subr.mxu0 0.0
      %204 = vmatpush1.msra.mxu0 0.0
      %205 = vmatprep.subr.mxu0 0.0
      %206 = vmatpush1.msra.mxu0 0.0
      %207 = vmatprep.subr.mxu0 0.0
      %208 = vmatpush1.msra.mxu0 0.0
      %209 = vmatprep.subr.mxu0 0.0
      %210 = vmatpush1.msra.mxu0 0.0
      %211 = vmatprep.subr.mxu0 0.0
      %212 = vmatpush1.msra.mxu0 0.0
      %213 = vmatprep.subr.mxu0 0.0
      %214 = vmatpush1.msra.mxu0 0.0
      %215 = vmatprep.subr.mxu0 0.0
      %216 = vmatpush1.msra.mxu0 %v156
      %217 = vmatprep.subr.mxu0 0.0
      %218 = vmatpush1.msra.mxu0 %v155
      %219 = vmatprep.subr.mxu0 0.0
      %220 = vmatpush2.msra.mxu0 0.0
      %221 = vmatprep.subr.mxu0 0.0
      %222 = vmatpush2.msra.mxu0 0.0
      %223 = vmatprep.subr.mxu0 0.0
      %224 = vmatpush2.msra.mxu0 0.0
      %225 = vmatprep.subr.mxu0 0.0
      %226 = vmatpush2.msra.mxu0 0.0
      %227 = vmatprep.subr.mxu0 0.0
      %228 = vmatpush2.msra.mxu0 0.0
      %229 = vmatprep.subr.mxu0 0.0
      %230 = vmatpush2.msra.mxu0 0.0
      %231 = vmatprep.subr.mxu0 0.0
      %232 = vmatpush2.msra.mxu0 0.0
      %233 = vmatprep.subr.mxu0 0.0
      %234 = vmatpush2.msra.mxu0 0.0
      %235 = vmatprep.subr.mxu0 0.0
      %236 = vmatpush2.msra.mxu0 0.0
      %237 = vmatprep.subr.mxu0 0.0
      %238 = vmatpush2.msra.mxu0 0.0
      %239 = vmatprep.subr.mxu0 0.0
      %240 = vmatpush2.msra.mxu0 0.0
      %241 = vmatprep.subr.mxu0 0.0
      %242 = vmatpush2.msra.mxu0 0.0
      %243 = vmatprep.subr.mxu0 0.0
      %244 = vmatpush2.msra.mxu0 0.0
      %245 = vmatprep.subr.mxu0 0.0
      %246 = vmatpush2.msra.mxu0 0.0
      %247 = vmatprep.subr.mxu0 0.0
      %248 = vmatpush2.msra.mxu0 0.0
      %249 = vmatprep.subr.mxu0 0.0
      %250 = vmatpush2.msra.mxu0 0.0
      %251 = vmatprep.mubr.f32.mxu0 0.0
      %252 = vmatmul.mubr.f32.gmra.mxu0 %v164
      %v253 = vpop.f32.mrf.mxu0
      %v254 = vadd.f32 %v161, %v253
      %v255 = vpop.f32.mrf.mxu0
      %256 = vmatprep.mubr.f32.mxu0 0.0
      %257 = vmatmul.mubr.f32.gmra.mxu0 %v167
      %v258 = vpop.f32.mrf.mxu0
      %v259 = vadd.f32 %v161, %v258
      %v260 = vpop.f32.mrf.mxu0
      %261 = vmatprep.mubr.f32.mxu0 0.0
      %262 = vmatmul.mubr.f32.gmra.mxu0 %v170
      %v263 = vpop.f32.mrf.mxu0
      %v264 = vadd.f32 %v161, %v263
      %v265 = vpop.f32.mrf.mxu0
      %266 = vmatprep.mubr.f32.mxu0 0.0
      %267 = vmatmul.mubr.f32.gmra.mxu0 %v173
      %v268 = vpop.f32.mrf.mxu0
      %v269 = vadd.f32 %v161, %v268
      %v270 = vpop.f32.mrf.mxu0
      %271 = vmatprep.mubr.f32.mxu0 0.0
      %272 = vmatmul.mubr.f32.gmra.mxu0 %v176
      %v273 = vpop.f32.mrf.mxu0
      %v274 = vadd.f32 %v161, %v273
      %v275 = vpop.f32.mrf.mxu0
      %276 = vmatprep.mubr.f32.mxu0 0.0
      %277 = vmatmul.mubr.f32.gmra.mxu0 %v179
      %v278 = vpop.f32.mrf.mxu0
      %v279 = vadd.f32 %v161, %v278
      %v280 = vpop.f32.mrf.mxu0
      %281 = vmatprep.mubr.f32.mxu0 0.0
      %282 = vmatmul.mubr.f32.gmra.mxu0 %v182
      %v283 = vpop.f32.mrf.mxu0
      %v284 = vadd.f32 %v161, %v283
      %v285 = vpop.f32.mrf.mxu0
      %286 = vmatprep.mubr.f32.mxu0 0.0
      %287 = vmatmul.mubr.f32.gmra.mxu0 %v185
      %v288 = vpop.f32.mrf.mxu0
      %v289 = vadd.f32 %v161, %v288
      %v290 = vpop.f32.mrf.mxu0
      %291 = vdwg.mxu0
      %v292 = vmax.f32 %v254, 0.0
      %v293 = vmax.f32 %v259, 0.0
      %v294 = vmax.f32 %v264, 0.0
      %v295 = vmax.f32 %v269, 0.0
      %v296 = vmax.f32 %v274, 0.0
      %v297 = vmax.f32 %v279, 0.0
      %v298 = vmax.f32 %v284, 0.0
      %v299 = vmax.f32 %v289, 0.0
      %v300 = vld [vmem:[%s1 + $0x18] sm:$0xff]
      %v301 = vld [vmem:[%s1 + $0x20] sm:$0xff]
      %v302 = vld [vmem:[%s1 + $0x28] sm:$0xff]
      %v303 = vld [vmem:[%s1 + $0x30] sm:$0xff]
      %v304 = vld [vmem:[%s1 + $0x38] sm:$0x1]
      %v305 = vlaneseq
      %v306 = vshrl.u32 %v305, 7
      %v307 = vsub.s32 0, %v306
      %v308 = vrot.slane %v304, %v307
      %vm309 = vcmask 261120
      %v311 = vsel %vm309, %v292, 0
      %v314 = vsel %vm309, %v293, 0
      %v317 = vsel %vm309, %v294, 0
      %v320 = vsel %vm309, %v295, 0
      %v323 = vsel %vm309, %v296, 0
      %v326 = vsel %vm309, %v297, 0
      %v329 = vsel %vm309, %v298, 0
      %v332 = vsel %vm309, %v299, 0
      %334 = vmatprep.subr.mxu0 0.0
      %335 = vmatpush1.msra.mxu0 0.0
      %336 = vmatprep.subr.mxu0 0.0
      %337 = vmatpush1.msra.mxu0 0.0
      %338 = vmatprep.subr.mxu0 0.0
      %339 = vmatpush1.msra.mxu0 0.0
      %340 = vmatprep.subr.mxu0 0.0
      %341 = vmatpush1.msra.mxu0 0.0
      %342 = vmatprep.subr.mxu0 0.0
      %343 = vmatpush1.msra.mxu0 0.0
      %344 = vmatprep.subr.mxu0 0.0
      %345 = vmatpush1.msra.mxu0 0.0
      %346 = vmatprep.subr.mxu0 0.0
      %347 = vmatpush1.msra.mxu0 0.0
      %348 = vmatprep.subr.mxu0 0.0
      %349 = vmatpush1.msra.mxu0 0.0
      %350 = vmatprep.subr.mxu0 0.0
      %351 = vmatpush1.msra.mxu0 0.0
      %352 = vmatprep.subr.mxu0 0.0
      %353 = vmatpush1.msra.mxu0 0.0
      %354 = vmatprep.subr.mxu0 0.0
      %355 = vmatpush1.msra.mxu0 0.0
      %356 = vmatprep.subr.mxu0 0.0
      %357 = vmatpush1.msra.mxu0 0.0
      %358 = vmatprep.subr.mxu0 0.0
      %359 = vmatpush1.msra.mxu0 %v303
      %360 = vmatprep.subr.mxu0 0.0
      %361 = vmatpush1.msra.mxu0 %v302
      %362 = vmatprep.subr.mxu0 0.0
      %363 = vmatpush1.msra.mxu0 %v301
      %364 = vmatprep.subr.mxu0 0.0
      %365 = vmatpush1.msra.mxu0 %v300
      %366 = vmatprep.subr.mxu0 0.0
      %367 = vmatpush2.msra.mxu0 0.0
      %368 = vmatprep.subr.mxu0 0.0
      %369 = vmatpush2.msra.mxu0 0.0
      %370 = vmatprep.subr.mxu0 0.0
      %371 = vmatpush2.msra.mxu0 0.0
      %372 = vmatprep.subr.mxu0 0.0
      %373 = vmatpush2.msra.mxu0 0.0
      %374 = vmatprep.subr.mxu0 0.0
      %375 = vmatpush2.msra.mxu0 0.0
      %376 = vmatprep.subr.mxu0 0.0
      %377 = vmatpush2.msra.mxu0 0.0
      %378 = vmatprep.subr.mxu0 0.0
      %379 = vmatpush2.msra.mxu0 0.0
      %380 = vmatprep.subr.mxu0 0.0
      %381 = vmatpush2.msra.mxu0 0.0
      %382 = vmatprep.subr.mxu0 0.0
      %383 = vmatpush2.msra.mxu0 0.0
      %384 = vmatprep.subr.mxu0 0.0
      %385 = vmatpush2.msra.mxu0 0.0
      %386 = vmatprep.subr.mxu0 0.0
      %387 = vmatpush2.msra.mxu0 0.0
      %388 = vmatprep.subr.mxu0 0.0
      %389 = vmatpush2.msra.mxu0 0.0
      %390 = vmatprep.subr.mxu0 0.0
      %391 = vmatpush2.msra.mxu0 0.0
      %392 = vmatprep.subr.mxu0 0.0
      %393 = vmatpush2.msra.mxu0 0.0
      %394 = vmatprep.subr.mxu0 0.0
      %395 = vmatpush2.msra.mxu0 0.0
      %396 = vmatprep.subr.mxu0 0.0
      %397 = vmatpush2.msra.mxu0 0.0
      %398 = vmatprep.mubr.f32.mxu0 0.0
      %399 = vmatmul.mubr.f32.gmra.mxu0 %v311
      %v400 = vpop.f32.mrf.mxu0
      %v401 = vadd.f32 %v308, %v400
      %v402 = vpop.f32.mrf.mxu0
      %403 = vmatprep.mubr.f32.mxu0 0.0
      %404 = vmatmul.mubr.f32.gmra.mxu0 %v314
      %v405 = vpop.f32.mrf.mxu0
      %v406 = vadd.f32 %v308, %v405
      %v407 = vpop.f32.mrf.mxu0
      %408 = vmatprep.mubr.f32.mxu0 0.0
      %409 = vmatmul.mubr.f32.gmra.mxu0 %v317
      %v410 = vpop.f32.mrf.mxu0
      %v411 = vadd.f32 %v308, %v410
      %v412 = vpop.f32.mrf.mxu0
      %413 = vmatprep.mubr.f32.mxu0 0.0
      %414 = vmatmul.mubr.f32.gmra.mxu0 %v320
      %v415 = vpop.f32.mrf.mxu0
      %v416 = vadd.f32 %v308, %v415
      %v417 = vpop.f32.mrf.mxu0
      %418 = vmatprep.mubr.f32.mxu0 0.0
      %419 = vmatmul.mubr.f32.gmra.mxu0 %v323
      %v420 = vpop.f32.mrf.mxu0
      %v421 = vadd.f32 %v308, %v420
      %v422 = vpop.f32.mrf.mxu0
      %423 = vmatprep.mubr.f32.mxu0 0.0
      %424 = vmatmul.mubr.f32.gmra.mxu0 %v326
      %v425 = vpop.f32.mrf.mxu0
      %v426 = vadd.f32 %v308, %v425
      %v427 = vpop.f32.mrf.mxu0
      %428 = vmatprep.mubr.f32.mxu0 0.0
      %429 = vmatmul.mubr.f32.gmra.mxu0 %v329
      %v430 = vpop.f32.mrf.mxu0
      %v431 = vadd.f32 %v308, %v430
      %v432 = vpop.f32.mrf.mxu0
      %433 = vmatprep.mubr.f32.mxu0 0.0
      %434 = vmatmul.mubr.f32.gmra.mxu0 %v332
      %v435 = vpop.f32.mrf.mxu0
      %v436 = vadd.f32 %v308, %v435
      %v437 = vpop.f32.mrf.mxu0
      %438 = vdwg.mxu0
      %v439 = vmax.f32 %v401, 0.0
      %v440 = vmax.f32 %v406, 0.0
      %v441 = vmax.f32 %v411, 0.0
      %v442 = vmax.f32 %v416, 0.0
      %v443 = vmax.f32 %v421, 0.0
      %v444 = vmax.f32 %v426, 0.0
      %v445 = vmax.f32 %v431, 0.0
      %v446 = vmax.f32 %v436, 0.0
      %v447 = vld [vmem:[%s1 + $0x40] sm:$0xff]
      %v448 = vld [vmem:[%s1 + $0x48] sm:$0xff]
      %v449 = vld [vmem:[%s1 + $0x50] sm:$0xff]
      %v450 = vld [vmem:[%s1 + $0x58] sm:$0xff]
      %v451 = vld [vmem:[%s1 + $0x60] sm:$0x1]
      %v452 = vlaneseq
      %v453 = vshrl.u32 %v452, 7
      %v454 = vsub.s32 0, %v453
      %v455 = vrot.slane %v451, %v454
      %v457 = vsel %vm309, %v439, 0
      %v460 = vsel %vm309, %v440, 0
      %v463 = vsel %vm309, %v441, 0
      %v466 = vsel %vm309, %v442, 0
      %v469 = vsel %vm309, %v443, 0
      %v472 = vsel %vm309, %v444, 0
      %v475 = vsel %vm309, %v445, 0
      %v478 = vsel %vm309, %v446, 0
      %480 = vmatprep.subr.mxu0 0.0
      %481 = vmatpush1.msra.mxu0 0.0
      %482 = vmatprep.subr.mxu0 0.0
      %483 = vmatpush1.msra.mxu0 0.0
      %484 = vmatprep.subr.mxu0 0.0
      %485 = vmatpush1.msra.mxu0 0.0
      %486 = vmatprep.subr.mxu0 0.0
      %487 = vmatpush1.msra.mxu0 0.0
      %488 = vmatprep.subr.mxu0 0.0
      %489 = vmatpush1.msra.mxu0 0.0
      %490 = vmatprep.subr.mxu0 0.0
      %491 = vmatpush1.msra.mxu0 0.0
      %492 = vmatprep.subr.mxu0 0.0
      %493 = vmatpush1.msra.mxu0 0.0
      %494 = vmatprep.subr.mxu0 0.0
      %495 = vmatpush1.msra.mxu0 0.0
      %496 = vmatprep.subr.mxu0 0.0
      %497 = vmatpush1.msra.mxu0 0.0
      %498 = vmatprep.subr.mxu0 0.0
      %499 = vmatpush1.msra.mxu0 0.0
      %500 = vmatprep.subr.mxu0 0.0
      %501 = vmatpush1.msra.mxu0 0.0
      %502 = vmatprep.subr.mxu0 0.0
      %503 = vmatpush1.msra.mxu0 0.0
      %504 = vmatprep.subr.mxu0 0.0
      %505 = vmatpush1.msra.mxu0 %v450
      %506 = vmatprep.subr.mxu0 0.0
      %507 = vmatpush1.msra.mxu0 %v449
      %508 = vmatprep.subr.mxu0 0.0
      %509 = vmatpush1.msra.mxu0 %v448
      %510 = vmatprep.subr.mxu0 0.0
      %511 = vmatpush1.msra.mxu0 %v447
      %512 = vmatprep.subr.mxu0 0.0
      %513 = vmatpush2.msra.mxu0 0.0
      %514 = vmatprep.subr.mxu0 0.0
      %515 = vmatpush2.msra.mxu0 0.0
      %516 = vmatprep.subr.mxu0 0.0
      %517 = vmatpush2.msra.mxu0 0.0
      %518 = vmatprep.subr.mxu0 0.0
      %519 = vmatpush2.msra.mxu0 0.0
      %520 = vmatprep.subr.mxu0 0.0
      %521 = vmatpush2.msra.mxu0 0.0
      %522 = vmatprep.subr.mxu0 0.0
      %523 = vmatpush2.msra.mxu0 0.0
      %524 = vmatprep.subr.mxu0 0.0
      %525 = vmatpush2.msra.mxu0 0.0
      %526 = vmatprep.subr.mxu0 0.0
      %527 = vmatpush2.msra.mxu0 0.0
      %528 = vmatprep.subr.mxu0 0.0
      %529 = vmatpush2.msra.mxu0 0.0
      %530 = vmatprep.subr.mxu0 0.0
      %531 = vmatpush2.msra.mxu0 0.0
      %532 = vmatprep.subr.mxu0 0.0
      %533 = vmatpush2.msra.mxu0 0.0
      %534 = vmatprep.subr.mxu0 0.0
      %535 = vmatpush2.msra.mxu0 0.0
      %536 = vmatprep.subr.mxu0 0.0
      %537 = vmatpush2.msra.mxu0 0.0
      %538 = vmatprep.subr.mxu0 0.0
      %539 = vmatpush2.msra.mxu0 0.0
      %540 = vmatprep.subr.mxu0 0.0
      %541 = vmatpush2.msra.mxu0 0.0
      %542 = vmatprep.subr.mxu0 0.0
      %543 = vmatpush2.msra.mxu0 0.0
      %544 = vmatprep.mubr.f32.mxu0 0.0
      %545 = vmatmul.mubr.f32.gmra.mxu0 %v457
      %v546 = vpop.f32.mrf.mxu0
      %v547 = vadd.f32 %v455, %v546
      %v548 = vpop.f32.mrf.mxu0
      %549 = vmatprep.mubr.f32.mxu0 0.0
      %550 = vmatmul.mubr.f32.gmra.mxu0 %v460
      %v551 = vpop.f32.mrf.mxu0
      %v552 = vadd.f32 %v455, %v551
      %v553 = vpop.f32.mrf.mxu0
      %554 = vmatprep.mubr.f32.mxu0 0.0
      %555 = vmatmul.mubr.f32.gmra.mxu0 %v463
      %v556 = vpop.f32.mrf.mxu0
      %v557 = vadd.f32 %v455, %v556
      %v558 = vpop.f32.mrf.mxu0
      %559 = vmatprep.mubr.f32.mxu0 0.0
      %560 = vmatmul.mubr.f32.gmra.mxu0 %v466
      %v561 = vpop.f32.mrf.mxu0
      %v562 = vadd.f32 %v455, %v561
      %v563 = vpop.f32.mrf.mxu0
      %564 = vmatprep.mubr.f32.mxu0 0.0
      %565 = vmatmul.mubr.f32.gmra.mxu0 %v469
      %v566 = vpop.f32.mrf.mxu0
      %v567 = vadd.f32 %v455, %v566
      %v568 = vpop.f32.mrf.mxu0
      %569 = vmatprep.mubr.f32.mxu0 0.0
      %570 = vmatmul.mubr.f32.gmra.mxu0 %v472
      %v571 = vpop.f32.mrf.mxu0
      %v572 = vadd.f32 %v455, %v571
      %v573 = vpop.f32.mrf.mxu0
      %574 = vmatprep.mubr.f32.mxu0 0.0
      %575 = vmatmul.mubr.f32.gmra.mxu0 %v475
      %v576 = vpop.f32.mrf.mxu0
      %v577 = vadd.f32 %v455, %v576
      %v578 = vpop.f32.mrf.mxu0
      %579 = vmatprep.mubr.f32.mxu0 0.0
      %580 = vmatmul.mubr.f32.gmra.mxu0 %v478
      %v581 = vpop.f32.mrf.mxu0
      %v582 = vadd.f32 %v455, %v581
      %v583 = vpop.f32.mrf.mxu0
      %584 = vdwg.mxu0
      %v585 = vmul.f32 %v547, inf
      %v586 = vmul.f32 %v552, inf
      %v587 = vmul.f32 %v557, inf
      %v588 = vmul.f32 %v562, inf
      %v589 = vmul.f32 %v567, inf
      %v590 = vmul.f32 %v572, inf
      %v591 = vmul.f32 %v577, inf
      %v592 = vmul.f32 %v582, inf
      %vm593 = vcmask 64512
      %594 = vst.msk [vmem:[%s145] sm:$0xff] %vm593, %v585
      %595 = vst.msk [vmem:[%s145 + $0x8] sm:$0xff] %vm593, %v586
      %596 = vst.msk [vmem:[%s145 + $0x10] sm:$0xff] %vm593, %v587
      %597 = vst.msk [vmem:[%s145 + $0x18] sm:$0xff] %vm593, %v588
      %598 = vst.msk [vmem:[%s145 + $0x20] sm:$0xff] %vm593, %v589
      %599 = vst.msk [vmem:[%s145 + $0x28] sm:$0xff] %vm593, %v590
      %600 = vst.msk [vmem:[%s145 + $0x30] sm:$0xff] %vm593, %v591
      %601 = vst.msk [vmem:[%s145 + $0x38] sm:$0xff] %vm593, %v592
      %s602 = smul.u32 8, %s13
      %p603 = scmp.lt.s32.totalorder %s602, 15
      %s604 = scalar_select %p603, %s602, 15
      %s605 = smul.addr %s604, 8
      %s606 = scalar_lea.vmem %s2, %s605
      // Predicated region
      $region29: #{tpu_custom_call.1} parent=27 // pred_check
        %p607 = pneg %p78
      $region30: #{tpu_custom_call.1} parent=27 // pred_check_branch
        %609 = sbr.rel (%p607) target = $region32
      $region31: #{tpu_custom_call.1} parent=27 // pred_region
        %s610 = smul.u32 8, %s13
      $region32: #{tpu_custom_call.1} parent=27 // pred_fallthru
        _
    $region28: #{tpu_custom_call.1} parent=5 // pred_fallthru
      _
    %p611 = scmp.le.s32.totalorder 2, %s8
    // Predicated region
    $region33: #{tpu_custom_call.1} parent=5 // pred_check
      %p612 = pneg %p611
    $region34: #{tpu_custom_call.1} parent=5 // pred_check_branch
      %614 = sbr.rel (%p612) target = $region36
    $region35: #{tpu_custom_call.1} parent=5 // pred_region
      %s615 = ssub.s32 %s8, 2
      // Predicated region
      $region37: #{tpu_custom_call.1} parent=35 // pred_check
        %p616 = pneg %p84
      $region38: #{tpu_custom_call.1} parent=35 // pred_check_branch
        %618 = sbr.rel (%p616) target = $region40
      $region39: #{tpu_custom_call.1} parent=35 // pred_region
        %s619 = smul.u32 8, %s14
        %p620 = scmp.lt.s32.totalorder %s619, 15
        %s621 = scalar_select %p620, %s619, 15
        %s622 = smul.addr %s621, 8
        %s623 = scalar_lea.vmem %s2, %s622
      $region40: #{tpu_custom_call.1} parent=35 // pred_fallthru
        _
    $region36: #{tpu_custom_call.1} parent=5 // pred_fallthru
      _
  $region6: #{tpu_custom_call.1} parent=0 // loop_footer
    %s12 = sadd.s32 1, %s8
  $region7: #{tpu_custom_call.1} parent=0 // loop_footer_branch
    %7 = sbr.rel target = $region3
  $region8: #{tpu_custom_call.1} parent=0 // loop_exit
    _

</llo_original>
